<compile_context>
chip_gen: v6e
topology: v6e:2x2x1
jax: 0.10.0
libtpu: 0.0.40
codegen_flags: <defaults>
</compile_context>

<pallas_src>
import functools

import jax
import jax.numpy as jnp
from jax.experimental import pallas as pl
from jax.experimental.pallas import tpu as pltpu

HIDDEN = 256


def _critic_kernel(s_ref, a_ref, w1s_ref, w1a_ref, b1_ref, w2_ref, b2_ref,
                   w3_ref, b3_ref, o_ref):
    # bf16 operands, f32 accumulation on the MXU.
    s = s_ref[...]                                   # (TILE_B, S) bf16
    a = a_ref[...]                                   # (TILE_B, A) bf16

    h1 = (jnp.dot(s, w1s_ref[...], preferred_element_type=jnp.float32)
          + jnp.dot(a, w1a_ref[...], preferred_element_type=jnp.float32)
          + b1_ref[...])                             # (TILE_B, 256) f32
    h1 = jnp.maximum(h1, 0.0)                        # ReLU in f32 (VPU)

    h2 = jnp.dot(h1.astype(jnp.bfloat16), w2_ref[...],
                 preferred_element_type=jnp.float32) + b2_ref[...]
    h2 = jnp.maximum(h2, 0.0)                        # (TILE_B, 256) f32

    # Final 256 -> 1 projection on the VPU + XLU (lane reduction); w3 is a
    # resident (1, 256) f32 row, b3 is (1, 1).
    q = jnp.sum(h2 * w3_ref[...], axis=-1, keepdims=True) + b3_ref[...]
    o_ref[...] = q.astype(o_ref.dtype)               # (TILE_B, 1)


def _round_up(x, m):
    return ((x + m - 1) // m) * m


@functools.partial(jax.jit, static_argnames=("tile_b",))
def critic_forward(state, action, params, *, tile_b=1024):
    """Pallas-backed Critic.forward(state, action) -> (B, 1) Q-values."""
    w1, b1, w2, b2, w3, b3 = params
    B, S = state.shape
    A = action.shape[1]

    # Clamp the batch tile for small batches; keep it a multiple of 8 sublanes.
    tb = min(tile_b, _round_up(B, 8))
    grid = (pl.cdiv(B, tb),)

    # bf16 matmul operands (inputs + weights); biases / w3 row stay f32.
    s_bf = state.astype(jnp.bfloat16)
    a_bf = action.astype(jnp.bfloat16)
    w1s = w1[:S].astype(jnp.bfloat16)                # (S, 256)
    w1a = w1[S:].astype(jnp.bfloat16)                # (A, 256)
    w2b = w2.astype(jnp.bfloat16)                    # (256, 256)
    w3r = w3.reshape(1, HIDDEN).astype(jnp.float32)  # (1, 256) row
    b1f = b1.astype(jnp.float32)
    b2f = b2.astype(jnp.float32)
    b3f = b3.reshape(1, 1).astype(jnp.float32)

    resident = lambda arr: pl.BlockSpec(arr.shape, lambda i: (0,) * arr.ndim)

    return pl.pallas_call(
        _critic_kernel,
        out_shape=jax.ShapeDtypeStruct((B, 1), jnp.float32),
        grid=grid,
        in_specs=[
            pl.BlockSpec((tb, S), lambda i: (i, 0)),   # state tile (pipelined)
            pl.BlockSpec((tb, A), lambda i: (i, 0)),   # action tile (pipelined)
            resident(w1s), resident(w1a), resident(b1f),
            resident(w2b), resident(b2f),
            resident(w3r), resident(b3f),
        ],
        out_specs=pl.BlockSpec((tb, 1), lambda i: (i, 0)),
        compiler_params=pltpu.CompilerParams(
            dimension_semantics=("parallel",)),
    )(s_bf, a_bf, w1s, w1a, b1f, w2b, b2f, w3r, b3f)


def init_critic_params(key, state_dim, action_dim, hidden=HIDDEN):
    """Deterministic init mirroring nn.Linear defaults: U(-1/sqrt(fan_in), 1/sqrt(fan_in)).

    Weights stored as (in_features, out_features); biases as (1, out_features).
    """
    d_in = state_dim + action_dim
    dims = [(d_in, hidden), (hidden, hidden), (hidden, 1)]
    params = []
    for (fan_in, fan_out) in dims:
        key, kw, kb = jax.random.split(key, 3)
        bound = 1.0 / jnp.sqrt(jnp.float32(fan_in))
        w = jax.random.uniform(kw, (fan_in, fan_out), jnp.float32, -bound, bound)
        b = jax.random.uniform(kb, (1, fan_out), jnp.float32, -bound, bound)
        params += [w, b]
    return tuple(params)


if __name__ == "__main__":
    state_dim, action_dim, batch = 16, 8, 2

    key = jax.random.PRNGKey(0)
    key, ks, ka, kp = jax.random.split(key, 4)
    state = jax.random.normal(ks, (batch, state_dim), jnp.float32)
    action = jax.random.normal(ka, (batch, action_dim), jnp.float32)
    params = init_critic_params(kp, state_dim, action_dim)

    q = critic_forward(state, action, params)
    jax.block_until_ready(q)
    assert q.shape == (batch, 1)

    w1, b1, w2, b2, w3, b3 = params

    # Reference 1: same bf16-operand / f32-accumulate math in plain JAX (tight).
    sb, ab = state.astype(jnp.bfloat16), action.astype(jnp.bfloat16)
    w1s, w1a = w1[:state_dim].astype(jnp.bfloat16), w1[state_dim:].astype(jnp.bfloat16)
    h1 = jnp.maximum(
        jnp.dot(sb, w1s, preferred_element_type=jnp.float32)
        + jnp.dot(ab, w1a, preferred_element_type=jnp.float32) + b1, 0.0)
    h2 = jnp.maximum(
        jnp.dot(h1.astype(jnp.bfloat16), w2.astype(jnp.bfloat16),
                preferred_element_type=jnp.float32) + b2, 0.0)
    q_bf16_ref = jnp.sum(h2 * w3.reshape(1, -1), axis=-1, keepdims=True) + b3
    assert jnp.allclose(q, q_bf16_ref, atol=1e-2, rtol=1e-2)

    # Reference 2: full f32 PyTorch-equivalent math (loose, bf16 operand error).
    x = jnp.concatenate([state, action], axis=1)
    hf = jnp.maximum(x @ w1 + b1, 0.0)
    hf = jnp.maximum(hf @ w2 + b2, 0.0)
    q_f32_ref = hf @ w3 + b3
    assert jnp.allclose(q, q_f32_ref, atol=1e-1, rtol=1e-1)

    print("KERNEL_OK")
</pallas_src>

<mosaic_0001>
module attributes {stable_mosaic.version = 11 : i64} {
  func.func @_critic_kernel(%arg0: i32, %arg1: memref<8x16xbf16, #tpu.memory_space<vmem>>, %arg2: memref<8x8xbf16, #tpu.memory_space<vmem>>, %arg3: memref<16x256xbf16, #tpu.memory_space<vmem>>, %arg4: memref<8x256xbf16, #tpu.memory_space<vmem>>, %arg5: memref<1x256xf32, #tpu.memory_space<vmem>>, %arg6: memref<256x256xbf16, #tpu.memory_space<vmem>>, %arg7: memref<1x256xf32, #tpu.memory_space<vmem>>, %arg8: memref<1x256xf32, #tpu.memory_space<vmem>>, %arg9: memref<1x1xf32, #tpu.memory_space<vmem>>, %arg10: memref<8x1xf32, #tpu.memory_space<vmem>>) attributes {dimension_semantics = [#tpu.dimension_semantics<parallel>], iteration_bounds = array<i64: 1>, scalar_prefetch = 0 : i64, scratch_operands = 0 : i64, tpu.core_type = #tpu.core_type<tc>, window_params = [{transform_indices = @transform_0, window_bounds = array<i64: 8, 16>}, {transform_indices = @transform_1, window_bounds = array<i64: 8, 8>}, {pipeline_mode = #tpu.pipeline_mode<synchronous>, transform_indices = @transform_2, window_bounds = array<i64: 16, 256>}, {pipeline_mode = #tpu.pipeline_mode<synchronous>, transform_indices = @transform_3, window_bounds = array<i64: 8, 256>}, {pipeline_mode = #tpu.pipeline_mode<synchronous>, transform_indices = @transform_4, window_bounds = array<i64: 1, 256>}, {pipeline_mode = #tpu.pipeline_mode<synchronous>, transform_indices = @transform_5, window_bounds = array<i64: 256, 256>}, {pipeline_mode = #tpu.pipeline_mode<synchronous>, transform_indices = @transform_6, window_bounds = array<i64: 1, 256>}, {pipeline_mode = #tpu.pipeline_mode<synchronous>, transform_indices = @transform_7, window_bounds = array<i64: 1, 256>}, {pipeline_mode = #tpu.pipeline_mode<synchronous>, transform_indices = @transform_8, window_bounds = array<i64: 1, 1>}, {transform_indices = @transform_9, window_bounds = array<i64: 8, 1>}]} {
    %c0 = arith.constant 0 : index
    %c0_0 = arith.constant 0 : index
    %0 = vector.load %arg1[%c0, %c0_0] : memref<8x16xbf16, #tpu.memory_space<vmem>>, vector<8x16xbf16>
    %c0_1 = arith.constant 0 : index
    %c0_2 = arith.constant 0 : index
    %1 = vector.load %arg2[%c0_1, %c0_2] : memref<8x8xbf16, #tpu.memory_space<vmem>>, vector<8x8xbf16>
    %c0_3 = arith.constant 0 : index
    %c0_4 = arith.constant 0 : index
    %2 = vector.load %arg3[%c0_3, %c0_4] : memref<16x256xbf16, #tpu.memory_space<vmem>>, vector<16x256xbf16>
    %cst = arith.constant dense<0.000000e+00> : vector<8x256xf32>
    %3 = tpu.matmul %0, %2, %cst {dimension_numbers = #tpu.dot_dimension_numbers<[1], [0], [0], [1], [0, 0, 1, 1], [], []>} : vector<8x16xbf16>, vector<16x256xbf16>, vector<8x256xf32> -> vector<8x256xf32>
    %c0_5 = arith.constant 0 : index
    %c0_6 = arith.constant 0 : index
    %4 = vector.load %arg4[%c0_5, %c0_6] : memref<8x256xbf16, #tpu.memory_space<vmem>>, vector<8x256xbf16>
    %cst_7 = arith.constant dense<0.000000e+00> : vector<8x256xf32>
    %5 = tpu.matmul %1, %4, %cst_7 {dimension_numbers = #tpu.dot_dimension_numbers<[1], [0], [0], [1], [0, 0, 1, 1], [], []>} : vector<8x8xbf16>, vector<8x256xbf16>, vector<8x256xf32> -> vector<8x256xf32>
    %6 = arith.addf %3, %5 : vector<8x256xf32>
    %c0_8 = arith.constant 0 : index
    %c0_9 = arith.constant 0 : index
    %7 = vector.load %arg5[%c0_8, %c0_9] : memref<1x256xf32, #tpu.memory_space<vmem>>, vector<1x256xf32>
    %8 = vector.broadcast %7 : vector<1x256xf32> to vector<8x256xf32>
    %9 = arith.addf %6, %8 : vector<8x256xf32>
    %cst_10 = arith.constant 0.000000e+00 : f32
    %10 = vector.broadcast %cst_10 : f32 to vector<8x256xf32>
    %11 = arith.maximumf %9, %10 : vector<8x256xf32>
    %12 = arith.truncf %11 : vector<8x256xf32> to vector<8x256xbf16>
    %c0_11 = arith.constant 0 : index
    %c0_12 = arith.constant 0 : index
    %13 = vector.load %arg6[%c0_11, %c0_12] : memref<256x256xbf16, #tpu.memory_space<vmem>>, vector<256x256xbf16>
    %cst_13 = arith.constant dense<0.000000e+00> : vector<8x256xf32>
    %14 = tpu.matmul %12, %13, %cst_13 {dimension_numbers = #tpu.dot_dimension_numbers<[1], [0], [0], [1], [0, 0, 1, 1], [], []>} : vector<8x256xbf16>, vector<256x256xbf16>, vector<8x256xf32> -> vector<8x256xf32>
    %c0_14 = arith.constant 0 : index
    %c0_15 = arith.constant 0 : index
    %15 = vector.load %arg7[%c0_14, %c0_15] : memref<1x256xf32, #tpu.memory_space<vmem>>, vector<1x256xf32>
    %16 = vector.broadcast %15 : vector<1x256xf32> to vector<8x256xf32>
    %17 = arith.addf %14, %16 : vector<8x256xf32>
    %cst_16 = arith.constant 0.000000e+00 : f32
    %18 = vector.broadcast %cst_16 : f32 to vector<8x256xf32>
    %19 = arith.maximumf %17, %18 : vector<8x256xf32>
    %c0_17 = arith.constant 0 : index
    %c0_18 = arith.constant 0 : index
    %20 = vector.load %arg8[%c0_17, %c0_18] : memref<1x256xf32, #tpu.memory_space<vmem>>, vector<1x256xf32>
    %21 = vector.broadcast %20 : vector<1x256xf32> to vector<8x256xf32>
    %22 = arith.mulf %19, %21 : vector<8x256xf32>
    %cst_19 = arith.constant dense<0.000000e+00> : vector<8xf32>
    %23 = vector.multi_reduction <add>, %22, %cst_19 [1] : vector<8x256xf32> to vector<8xf32>
    %24 = vector.shape_cast %23 : vector<8xf32> to vector<8x1xf32>
    %c0_20 = arith.constant 0 : index
    %c0_21 = arith.constant 0 : index
    %25 = vector.load %arg9[%c0_20, %c0_21] : memref<1x1xf32, #tpu.memory_space<vmem>>, vector<1x1xf32>
    %26 = vector.broadcast %25 : vector<1x1xf32> to vector<8x1xf32>
    %27 = arith.addf %24, %26 : vector<8x1xf32>
    %c0_22 = arith.constant 0 : index
    %c0_23 = arith.constant 0 : index
    %28 = vector.load %arg10[%c0_22, %c0_23] : memref<8x1xf32, #tpu.memory_space<vmem>>, vector<8x1xf32>
    tpu.vector_store %arg10[%c0_22, %c0_23], %27 {strides = array<i32>} : memref<8x1xf32, #tpu.memory_space<vmem>>, vector<8x1xf32>,
    return
  }
  func.func @transform_0(%arg0: i32) -> (i32, i32) {
    %c0_i32 = arith.constant 0 : i32
    %c0_i32_0 = arith.constant 0 : i32
    return %arg0, %c0_i32 : i32, i32
  }
  func.func @transform_1(%arg0: i32) -> (i32, i32) {
    %c0_i32 = arith.constant 0 : i32
    %c0_i32_0 = arith.constant 0 : i32
    return %arg0, %c0_i32 : i32, i32
  }
  func.func @transform_2(%arg0: i32) -> (i32, i32) {
    %c0_i32 = arith.constant 0 : i32
    %c0_i32_0 = arith.constant 0 : i32
    %c0_i32_1 = arith.constant 0 : i32
    return %c0_i32, %c0_i32_0 : i32, i32
  }
  func.func @transform_3(%arg0: i32) -> (i32, i32) {
    %c0_i32 = arith.constant 0 : i32
    %c0_i32_0 = arith.constant 0 : i32
    %c0_i32_1 = arith.constant 0 : i32
    return %c0_i32, %c0_i32_0 : i32, i32
  }
  func.func @transform_4(%arg0: i32) -> (i32, i32) {
    %c0_i32 = arith.constant 0 : i32
    %c0_i32_0 = arith.constant 0 : i32
    %c0_i32_1 = arith.constant 0 : i32
    return %c0_i32, %c0_i32_0 : i32, i32
  }
  func.func @transform_5(%arg0: i32) -> (i32, i32) {
    %c0_i32 = arith.constant 0 : i32
    %c0_i32_0 = arith.constant 0 : i32
    %c0_i32_1 = arith.constant 0 : i32
    return %c0_i32, %c0_i32_0 : i32, i32
  }
  func.func @transform_6(%arg0: i32) -> (i32, i32) {
    %c0_i32 = arith.constant 0 : i32
    %c0_i32_0 = arith.constant 0 : i32
    %c0_i32_1 = arith.constant 0 : i32
    return %c0_i32, %c0_i32_0 : i32, i32
  }
  func.func @transform_7(%arg0: i32) -> (i32, i32) {
    %c0_i32 = arith.constant 0 : i32
    %c0_i32_0 = arith.constant 0 : i32
    %c0_i32_1 = arith.constant 0 : i32
    return %c0_i32, %c0_i32_0 : i32, i32
  }
  func.func @transform_8(%arg0: i32) -> (i32, i32) {
    %c0_i32 = arith.constant 0 : i32
    %c0_i32_0 = arith.constant 0 : i32
    %c0_i32_1 = arith.constant 0 : i32
    return %c0_i32, %c0_i32_0 : i32, i32
  }
  func.func @transform_9(%arg0: i32) -> (i32, i32) {
    %c0_i32 = arith.constant 0 : i32
    %c0_i32_0 = arith.constant 0 : i32
    return %arg0, %c0_i32 : i32, i32
  }
}

</mosaic_0001>

<llo_original>
// kernel: critic_forward.1
$region0: #{critic_forward.1}
  #allocation0 [shape = 'u32[]', space=smem, size = 0x4, offset = 0x4, fixed_abs, tag = 'smem constant byte address 0x4 - core index']
  #allocation1 [shape = 'u32[144,128]{1,0:T(1,128)}', space=vmem, size = 0x12000, scoped, tag = 'internal scratch']
  #allocation2 [shape = 'f32[1,1]{1,0:T(1,128)S(1)}', space=vmem, size = 0x200, scoped, tag = 'scoped memory for critic_forward.1']
  %s0 = inlined_call_operand.vmem [shape: bf16[2,16], index: 0, kind: input, shape index: {}]
  %s1 = inlined_call_operand.vmem [shape: bf16[2,8], index: 1, kind: input, shape index: {}]
  %s2 = inlined_call_operand.vmem [shape: bf16[16,256], index: 2, kind: input, shape index: {}]
  %s3 = inlined_call_operand.vmem [shape: bf16[8,256], index: 3, kind: input, shape index: {}]
  %s4 = inlined_call_operand.vmem [shape: f32[1,256], index: 4, kind: input, shape index: {}]
  %s5 = inlined_call_operand.vmem [shape: bf16[256,256], index: 5, kind: input, shape index: {}]
  %s6 = inlined_call_operand.vmem [shape: f32[1,256], index: 6, kind: input, shape index: {}]
  %s7 = inlined_call_operand.vmem [shape: f32[1,256], index: 7, kind: input, shape index: {}]
  %s8 = inlined_call_operand.<no memory space> [shape: f32[1,1], index: 8, kind: input, shape index: {}]
  %s9 = inlined_call_operand.vmem [shape: f32[2,1], index: 9, kind: output, shape index: {}]
  %s10 = sld [smem:[#allocation0]]
  $region76: #{critic_forward.1} parent=0
    _
  %s12 = ssub.s32 1, %s10
  %s13 = scalar_select 0, %s12, %s10
  %v14 = vstv %s8
  %15 = vst [vmem:[#allocation2] sm:$0x1] %v14
  $region1: #{critic_forward.1} parent=0
    #allocation3 [shape = 'u8[4096]{0}', space=vmem, size = 0x1000, scoped, tag = 'output window, operand 0, single buffered']
    // Predicated region
    $region2: #{critic_forward.1} parent=1 // pred_check
      _
    $region3: #{critic_forward.1} parent=1 // pred_check_branch
      %17 = sbr.rel (0) target = $region5
    $region4: #{critic_forward.1} parent=1 // pred_region
      _
    $region5: #{critic_forward.1} parent=1 // pred_fallthru
      _
    // Predicated region
    $region6: #{critic_forward.1} parent=1 // pred_check
      _
    $region7: #{critic_forward.1} parent=1 // pred_check_branch
      %19 = sbr.rel (0) target = $region9
    $region8: #{critic_forward.1} parent=1 // pred_region
      _
    $region9: #{critic_forward.1} parent=1 // pred_fallthru
      _
    // Predicated region
    $region10: #{critic_forward.1} parent=1 // pred_check
      _
    $region11: #{critic_forward.1} parent=1 // pred_check_branch
      %21 = sbr.rel (0) target = $region13
    $region12: #{critic_forward.1} parent=1 // pred_region
      _
    $region13: #{critic_forward.1} parent=1 // pred_fallthru
      _
    // Predicated region
    $region14: #{critic_forward.1} parent=1 // pred_check
      _
    $region15: #{critic_forward.1} parent=1 // pred_check_branch
      %23 = sbr.rel (0) target = $region17
    $region16: #{critic_forward.1} parent=1 // pred_region
      _
    $region17: #{critic_forward.1} parent=1 // pred_fallthru
      _
    // Predicated region
    $region18: #{critic_forward.1} parent=1 // pred_check
      _
    $region19: #{critic_forward.1} parent=1 // pred_check_branch
      %25 = sbr.rel (0) target = $region21
    $region20: #{critic_forward.1} parent=1 // pred_region
      _
    $region21: #{critic_forward.1} parent=1 // pred_fallthru
      _
    // Predicated region
    $region22: #{critic_forward.1} parent=1 // pred_check
      _
    $region23: #{critic_forward.1} parent=1 // pred_check_branch
      %27 = sbr.rel (0) target = $region25
    $region24: #{critic_forward.1} parent=1 // pred_region
      _
    $region25: #{critic_forward.1} parent=1 // pred_fallthru
      _
    // Predicated region
    $region26: #{critic_forward.1} parent=1 // pred_check
      _
    $region27: #{critic_forward.1} parent=1 // pred_check_branch
      %29 = sbr.rel (0) target = $region29
    $region28: #{critic_forward.1} parent=1 // pred_region
      _
    $region29: #{critic_forward.1} parent=1 // pred_fallthru
      _
    // Predicated region
    $region30: #{critic_forward.1} parent=1 // pred_check
      _
    $region31: #{critic_forward.1} parent=1 // pred_check_branch
      %31 = sbr.rel (0) target = $region33
    $region32: #{critic_forward.1} parent=1 // pred_region
      _
    $region33: #{critic_forward.1} parent=1 // pred_fallthru
      _
    // Predicated region
    $region34: #{critic_forward.1} parent=1 // pred_check
      _
    $region35: #{critic_forward.1} parent=1 // pred_check_branch
      %33 = sbr.rel (0) target = $region37
    $region36: #{critic_forward.1} parent=1 // pred_region
      _
    $region37: #{critic_forward.1} parent=1 // pred_fallthru
      _
    %v35 = vld [vmem:[%s0] sm:$0x1]
    %v36 = vld [vmem:[%s0 + $0x1] sm:$0x1]
    %v37 = vld [vmem:[%s0 + $0x2] sm:$0x1]
    %v38 = vld [vmem:[%s0 + $0x3] sm:$0x1]
    %v39 = vld [vmem:[%s1] sm:$0x1]
    %v40 = vld [vmem:[%s1 + $0x1] sm:$0x1]
    %v41 = vld [vmem:[%s1 + $0x2] sm:$0x1]
    %v42 = vld [vmem:[%s1 + $0x3] sm:$0x1]
    %v43 = vld [vmem:[%s2] sm:$0xff]
    %v44 = vld [vmem:[%s2 + $0x8] sm:$0xff]
    %v45 = vld [vmem:[%s3] sm:$0xff]
    %v50 = vcombine.low %v39, %v40
    %v51 = vcombine.low %v41, %v42
    %v53 = vunpack.c.l.s4 1966171168
    %v54 = vunpack.c.0.s8 %v53
    %v55 = vlaneseq
    %v56 = vshrl.u32 %v55, 7
    %v57 = vsub.s32 %v54, %v56
    %v58 = vrot.slane %v50, %v57
    %v60 = vunpack.c.l.s4 1966171168
    %v61 = vunpack.c.0.s8 %v60
    %v62 = vlaneseq
    %v63 = vshrl.u32 %v62, 7
    %v64 = vsub.s32 %v61, %v63
    %v65 = vrot.slane %v51, %v64
    %v66 = vcombine.low %v58, %v65
    %v68 = vunpack.c.l.s4 1966171168
    %v69 = vunpack.c.0.s8 %v68
    %v70 = vlaneseq
    %v71 = vshrl.u32 %v70, 7
    %v72 = vsub.s32 %v69, %v71
    %v73 = vrot.slane %v66, %v72
    %v75 = vunpack.c.l.b16 %v45
    %v76 = vunpack.c.h.b16 %v45
    %v77 = vpack.c.b16 %v75, %v75
    %v78 = vpack.c.b16 %v76, %v76
    %vm79 = vcmask 64512
    %v81 = vsel %vm79, %v73, 0
    %vm83 = vcmask 1043456
    %v85 = vsel %vm83, %v77, 0
    %v88 = vsel %vm83, %v78, 0
    %90 = vmatprep.subr.bf16.mxu0 0
    %91 = vmatpush1.bf16.msra.mxu0 0
    %92 = vmatprep.subr.bf16.mxu0 0
    %93 = vmatpush1.bf16.msra.mxu0 0
    %94 = vmatprep.subr.bf16.mxu0 0
    %95 = vmatpush1.bf16.msra.mxu0 0
    %96 = vmatprep.subr.bf16.mxu0 0
    %97 = vmatpush1.bf16.msra.mxu0 0
    %98 = vmatprep.subr.bf16.mxu0 0
    %99 = vmatpush1.bf16.msra.mxu0 0
    %100 = vmatprep.subr.bf16.mxu0 0
    %101 = vmatpush1.bf16.msra.mxu0 0
    %102 = vmatprep.subr.bf16.mxu0 0
    %103 = vmatpush1.bf16.msra.mxu0 0
    %104 = vmatprep.subr.bf16.mxu0 %v88
    %105 = vmatpush1.bf16.msra.mxu0 %v85
    %106 = vmatprep.subr.bf16.mxu0 0
    %107 = vmatpush2.bf16.msra.mxu0 0
    %108 = vmatprep.subr.bf16.mxu0 0
    %109 = vmatpush2.bf16.msra.mxu0 0
    %110 = vmatprep.subr.bf16.mxu0 0
    %111 = vmatpush2.bf16.msra.mxu0 0
    %112 = vmatprep.subr.bf16.mxu0 0
    %113 = vmatpush2.bf16.msra.mxu0 0
    %114 = vmatprep.subr.bf16.mxu0 0
    %115 = vmatpush2.bf16.msra.mxu0 0
    %116 = vmatprep.subr.bf16.mxu0 0
    %117 = vmatpush2.bf16.msra.mxu0 0
    %118 = vmatprep.subr.bf16.mxu0 0
    %119 = vmatpush2.bf16.msra.mxu0 0
    %120 = vmatprep.subr.bf16.mxu0 0
    %121 = vmatpush2.bf16.msra.mxu0 0
    %122 = vmatprep.mubr.bf16.mxu0 0
    %123 = vmatmul.mubr.bf16.gmra.mxu0 %v81
    %v124 = vpop.f32.mrf.mxu0
    %v125 = vadd.f32 0.0, %v124
    %v126 = vpop.f32.mrf.mxu0
    %v127 = vadd.f32 0.0, %v126
    %v128 = vpop.f32.mrf.mxu0
    %v129 = vpop.f32.mrf.mxu0
    %130 = vdwg.mxu0
    %v135 = vcombine.low %v35, %v36
    %v136 = vcombine.low %v37, %v38
    %v138 = vunpack.c.l.s4 1966171168
    %v139 = vunpack.c.0.s8 %v138
    %v140 = vlaneseq
    %v141 = vshrl.u32 %v140, 7
    %v142 = vsub.s32 %v139, %v141
    %v143 = vrot.slane %v135, %v142
    %v145 = vunpack.c.l.s4 1966171168
    %v146 = vunpack.c.0.s8 %v145
    %v147 = vlaneseq
    %v148 = vshrl.u32 %v147, 7
    %v149 = vsub.s32 %v146, %v148
    %v150 = vrot.slane %v136, %v149
    %v151 = vcombine.low %v143, %v150
    %v153 = vunpack.c.l.s4 1966171168
    %v154 = vunpack.c.0.s8 %v153
    %v155 = vlaneseq
    %v156 = vshrl.u32 %v155, 7
    %v157 = vsub.s32 %v154, %v156
    %v158 = vrot.slane %v151, %v157
    %v161 = vunpack.c.l.b16 %v43
    %v162 = vunpack.c.h.b16 %v43
    %v163 = vunpack.c.l.b16 %v44
    %v164 = vunpack.c.h.b16 %v44
    %v165 = vpack.c.b16 %v163, %v161
    %v166 = vpack.c.b16 %v164, %v162
    %vm169 = vcmask 130048
    %v171 = vsel %vm169, %v158, 0
    %173 = vmatprep.subr.bf16.mxu0 0
    %174 = vmatpush1.bf16.msra.mxu0 0
    %175 = vmatprep.subr.bf16.mxu0 0
    %176 = vmatpush1.bf16.msra.mxu0 0
    %177 = vmatprep.subr.bf16.mxu0 0
    %178 = vmatpush1.bf16.msra.mxu0 0
    %179 = vmatprep.subr.bf16.mxu0 0
    %180 = vmatpush1.bf16.msra.mxu0 0
    %181 = vmatprep.subr.bf16.mxu0 0
    %182 = vmatpush1.bf16.msra.mxu0 0
    %183 = vmatprep.subr.bf16.mxu0 0
    %184 = vmatpush1.bf16.msra.mxu0 0
    %185 = vmatprep.subr.bf16.mxu0 0
    %186 = vmatpush1.bf16.msra.mxu0 0
    %187 = vmatprep.subr.bf16.mxu0 %v166
    %188 = vmatpush1.bf16.msra.mxu0 %v165
    %189 = vmatprep.subr.bf16.mxu0 0
    %190 = vmatpush2.bf16.msra.mxu0 0
    %191 = vmatprep.subr.bf16.mxu0 0
    %192 = vmatpush2.bf16.msra.mxu0 0
    %193 = vmatprep.subr.bf16.mxu0 0
    %194 = vmatpush2.bf16.msra.mxu0 0
    %195 = vmatprep.subr.bf16.mxu0 0
    %196 = vmatpush2.bf16.msra.mxu0 0
    %197 = vmatprep.subr.bf16.mxu0 0
    %198 = vmatpush2.bf16.msra.mxu0 0
    %199 = vmatprep.subr.bf16.mxu0 0
    %200 = vmatpush2.bf16.msra.mxu0 0
    %201 = vmatprep.subr.bf16.mxu0 0
    %202 = vmatpush2.bf16.msra.mxu0 0
    %203 = vmatprep.subr.bf16.mxu0 0
    %204 = vmatpush2.bf16.msra.mxu0 0
    %205 = vmatprep.mubr.bf16.mxu0 0
    %206 = vmatmul.mubr.bf16.gmra.mxu0 %v171
    %v207 = vpop.f32.mrf.mxu0
    %v208 = vadd.f32 %v125, %v207
    %v209 = vpop.f32.mrf.mxu0
    %v210 = vadd.f32 %v127, %v209
    %v211 = vpop.f32.mrf.mxu0
    %v212 = vpop.f32.mrf.mxu0
    %213 = vdwg.mxu0
    %v214 = vld [vmem:[%s4] sm:$0x3]
    %v216 = vlaneseq
    %v217 = vshrl.u32 %v216, 7
    %v218 = vsub.s32 0, %v217
    %v219 = vrot.slane %v214, %v218
    %v220 = vlaneseq
    %v221 = vshrl.u32 %v220, 7
    %v222 = vsub.s32 1, %v221
    %v223 = vrot.slane %v214, %v222
    %v226 = vadd.f32 %v208, %v219
    %v227 = vadd.f32 %v210, %v223
    %v228 = vmax.f32 %v226, 0.0
    %v229 = vmax.f32 %v227, 0.0
    %v230 = vpack.c.bf16 %v228, %v228
    %v231 = vpack.c.bf16 %v229, %v229
    %v232 = vld [vmem:[%s5] sm:$0xff]
    %v233 = vld [vmem:[%s5 + $0x8] sm:$0xff]
    %v234 = vld [vmem:[%s5 + $0x10] sm:$0xff]
    %v235 = vld [vmem:[%s5 + $0x18] sm:$0xff]
    %v236 = vld [vmem:[%s5 + $0x20] sm:$0xff]
    %v237 = vld [vmem:[%s5 + $0x28] sm:$0xff]
    %v238 = vld [vmem:[%s5 + $0x30] sm:$0xff]
    %v239 = vld [vmem:[%s5 + $0x38] sm:$0xff]
    %v240 = vld [vmem:[%s5 + $0x40] sm:$0xff]
    %v241 = vld [vmem:[%s5 + $0x48] sm:$0xff]
    %v242 = vld [vmem:[%s5 + $0x50] sm:$0xff]
    %v243 = vld [vmem:[%s5 + $0x58] sm:$0xff]
    %v244 = vld [vmem:[%s5 + $0x60] sm:$0xff]
    %v245 = vld [vmem:[%s5 + $0x68] sm:$0xff]
    %v246 = vld [vmem:[%s5 + $0x70] sm:$0xff]
    %v247 = vld [vmem:[%s5 + $0x78] sm:$0xff]
    %v248 = vld [vmem:[%s5 + $0x80] sm:$0xff]
    %v249 = vld [vmem:[%s5 + $0x88] sm:$0xff]
    %v250 = vld [vmem:[%s5 + $0x90] sm:$0xff]
    %v251 = vld [vmem:[%s5 + $0x98] sm:$0xff]
    %v252 = vld [vmem:[%s5 + $0xa0] sm:$0xff]
    %v253 = vld [vmem:[%s5 + $0xa8] sm:$0xff]
    %v254 = vld [vmem:[%s5 + $0xb0] sm:$0xff]
    %v255 = vld [vmem:[%s5 + $0xb8] sm:$0xff]
    %v256 = vld [vmem:[%s5 + $0xc0] sm:$0xff]
    %v257 = vld [vmem:[%s5 + $0xc8] sm:$0xff]
    %v258 = vld [vmem:[%s5 + $0xd0] sm:$0xff]
    %v259 = vld [vmem:[%s5 + $0xd8] sm:$0xff]
    %v260 = vld [vmem:[%s5 + $0xe0] sm:$0xff]
    %v261 = vld [vmem:[%s5 + $0xe8] sm:$0xff]
    %v262 = vld [vmem:[%s5 + $0xf0] sm:$0xff]
    %v263 = vld [vmem:[%s5 + $0xf8] sm:$0xff]
    %v264 = vld [vmem:[%s6] sm:$0x3]
    %v266 = vlaneseq
    %v267 = vshrl.u32 %v266, 7
    %v268 = vsub.s32 0, %v267
    %v269 = vrot.slane %v264, %v268
    %v270 = vlaneseq
    %v271 = vshrl.u32 %v270, 7
    %v272 = vsub.s32 1, %v271
    %v273 = vrot.slane %v264, %v272
    %v308 = vunpack.c.l.b16 %v232
    %v309 = vunpack.c.h.b16 %v232
    %v310 = vunpack.c.l.b16 %v233
    %v311 = vunpack.c.h.b16 %v233
    %v312 = vunpack.c.l.b16 %v234
    %v313 = vunpack.c.h.b16 %v234
    %v314 = vunpack.c.l.b16 %v235
    %v315 = vunpack.c.h.b16 %v235
    %v316 = vunpack.c.l.b16 %v236
    %v317 = vunpack.c.h.b16 %v236
    %v318 = vunpack.c.l.b16 %v237
    %v319 = vunpack.c.h.b16 %v237
    %v320 = vunpack.c.l.b16 %v238
    %v321 = vunpack.c.h.b16 %v238
    %v322 = vunpack.c.l.b16 %v239
    %v323 = vunpack.c.h.b16 %v239
    %v324 = vunpack.c.l.b16 %v240
    %v325 = vunpack.c.h.b16 %v240
    %v326 = vunpack.c.l.b16 %v241
    %v327 = vunpack.c.h.b16 %v241
    %v328 = vunpack.c.l.b16 %v242
    %v329 = vunpack.c.h.b16 %v242
    %v330 = vunpack.c.l.b16 %v243
    %v331 = vunpack.c.h.b16 %v243
    %v332 = vunpack.c.l.b16 %v244
    %v333 = vunpack.c.h.b16 %v244
    %v334 = vunpack.c.l.b16 %v245
    %v335 = vunpack.c.h.b16 %v245
    %v336 = vunpack.c.l.b16 %v246
    %v337 = vunpack.c.h.b16 %v246
    %v338 = vunpack.c.l.b16 %v247
    %v339 = vunpack.c.h.b16 %v247
    %v340 = vunpack.c.l.b16 %v248
    %v341 = vunpack.c.h.b16 %v248
    %v342 = vunpack.c.l.b16 %v249
    %v343 = vunpack.c.h.b16 %v249
    %v344 = vunpack.c.l.b16 %v250
    %v345 = vunpack.c.h.b16 %v250
    %v346 = vunpack.c.l.b16 %v251
    %v347 = vunpack.c.h.b16 %v251
    %v348 = vunpack.c.l.b16 %v252
    %v349 = vunpack.c.h.b16 %v252
    %v350 = vunpack.c.l.b16 %v253
    %v351 = vunpack.c.h.b16 %v253
    %v352 = vunpack.c.l.b16 %v254
    %v353 = vunpack.c.h.b16 %v254
    %v354 = vunpack.c.l.b16 %v255
    %v355 = vunpack.c.h.b16 %v255
    %v356 = vunpack.c.l.b16 %v256
    %v357 = vunpack.c.h.b16 %v256
    %v358 = vunpack.c.l.b16 %v257
    %v359 = vunpack.c.h.b16 %v257
    %v360 = vunpack.c.l.b16 %v258
    %v361 = vunpack.c.h.b16 %v258
    %v362 = vunpack.c.l.b16 %v259
    %v363 = vunpack.c.h.b16 %v259
    %v364 = vunpack.c.l.b16 %v260
    %v365 = vunpack.c.h.b16 %v260
    %v366 = vunpack.c.l.b16 %v261
    %v367 = vunpack.c.h.b16 %v261
    %v368 = vunpack.c.l.b16 %v262
    %v369 = vunpack.c.h.b16 %v262
    %v370 = vunpack.c.l.b16 %v263
    %v371 = vunpack.c.h.b16 %v263
    %v372 = vpack.c.b16 %v310, %v308
    %v373 = vpack.c.b16 %v311, %v309
    %v374 = vpack.c.b16 %v314, %v312
    %v375 = vpack.c.b16 %v315, %v313
    %v376 = vpack.c.b16 %v318, %v316
    %v377 = vpack.c.b16 %v319, %v317
    %v378 = vpack.c.b16 %v322, %v320
    %v379 = vpack.c.b16 %v323, %v321
    %v380 = vpack.c.b16 %v326, %v324
    %v381 = vpack.c.b16 %v327, %v325
    %v382 = vpack.c.b16 %v330, %v328
    %v383 = vpack.c.b16 %v331, %v329
    %v384 = vpack.c.b16 %v334, %v332
    %v385 = vpack.c.b16 %v335, %v333
    %v386 = vpack.c.b16 %v338, %v336
    %v387 = vpack.c.b16 %v339, %v337
    %v388 = vpack.c.b16 %v342, %v340
    %v389 = vpack.c.b16 %v343, %v341
    %v390 = vpack.c.b16 %v346, %v344
    %v391 = vpack.c.b16 %v347, %v345
    %v392 = vpack.c.b16 %v350, %v348
    %v393 = vpack.c.b16 %v351, %v349
    %v394 = vpack.c.b16 %v354, %v352
    %v395 = vpack.c.b16 %v355, %v353
    %v396 = vpack.c.b16 %v358, %v356
    %v397 = vpack.c.b16 %v359, %v357
    %v398 = vpack.c.b16 %v362, %v360
    %v399 = vpack.c.b16 %v363, %v361
    %v400 = vpack.c.b16 %v366, %v364
    %v401 = vpack.c.b16 %v367, %v365
    %v402 = vpack.c.b16 %v370, %v368
    %v403 = vpack.c.b16 %v371, %v369
    %436 = vmatprep.subr.bf16.mxu0 %v387
    %437 = vmatpush1.bf16.msra.mxu0 %v386
    %438 = vmatprep.subr.bf16.mxu0 %v385
    %439 = vmatpush1.bf16.msra.mxu0 %v384
    %440 = vmatprep.subr.bf16.mxu0 %v383
    %441 = vmatpush1.bf16.msra.mxu0 %v382
    %442 = vmatprep.subr.bf16.mxu0 %v381
    %443 = vmatpush1.bf16.msra.mxu0 %v380
    %444 = vmatprep.subr.bf16.mxu0 %v379
    %445 = vmatpush1.bf16.msra.mxu0 %v378
    %446 = vmatprep.subr.bf16.mxu0 %v377
    %447 = vmatpush1.bf16.msra.mxu0 %v376
    %448 = vmatprep.subr.bf16.mxu0 %v375
    %449 = vmatpush1.bf16.msra.mxu0 %v374
    %450 = vmatprep.subr.bf16.mxu0 %v373
    %451 = vmatpush1.bf16.msra.mxu0 %v372
    %452 = vmatprep.subr.bf16.mxu0 %v403
    %453 = vmatpush2.bf16.msra.mxu0 %v402
    %454 = vmatprep.subr.bf16.mxu0 %v401
    %455 = vmatpush2.bf16.msra.mxu0 %v400
    %456 = vmatprep.subr.bf16.mxu0 %v399
    %457 = vmatpush2.bf16.msra.mxu0 %v398
    %458 = vmatprep.subr.bf16.mxu0 %v397
    %459 = vmatpush2.bf16.msra.mxu0 %v396
    %460 = vmatprep.subr.bf16.mxu0 %v395
    %461 = vmatpush2.bf16.msra.mxu0 %v394
    %462 = vmatprep.subr.bf16.mxu0 %v393
    %463 = vmatpush2.bf16.msra.mxu0 %v392
    %464 = vmatprep.subr.bf16.mxu0 %v391
    %465 = vmatpush2.bf16.msra.mxu0 %v390
    %466 = vmatprep.subr.bf16.mxu0 %v389
    %467 = vmatpush2.bf16.msra.mxu0 %v388
    %468 = vmatprep.mubr.bf16.mxu0 %v231
    %469 = vmatmul.mubr.bf16.gmra.mxu0 %v230
    %v470 = vpop.f32.mrf.mxu0
    %v471 = vadd.f32 %v269, %v470
    %v472 = vpop.f32.mrf.mxu0
    %v473 = vadd.f32 %v273, %v472
    %v474 = vpop.f32.mrf.mxu0
    %v475 = vpop.f32.mrf.mxu0
    %476 = vdwg.mxu0
    %v477 = vmax.f32 %v471, 0.0
    %v478 = vmax.f32 %v473, 0.0
    %v479 = vld [vmem:[%s7] sm:$0x3]
    %v481 = vlaneseq
    %v482 = vshrl.u32 %v481, 7
    %v483 = vsub.s32 0, %v482
    %v484 = vrot.slane %v479, %v483
    %v485 = vlaneseq
    %v486 = vshrl.u32 %v485, 7
    %v487 = vsub.s32 1, %v486
    %v488 = vrot.slane %v479, %v487
    %v491 = vmul.f32 %v477, %v484
    %v492 = vmul.f32 %v478, %v488
    %v493 = vadd.f32 %v491, %v492
    %494 = vadd.xlane.f32.xlu0 %v493
    %v495 = vpop.xlane.xlu0 %494
    %v496 = vld [vmem:[#allocation2] sm:$0x1]
    %v498 = vlaneseq
    %v499 = vshrl.u32 %v498, 7
    %v500 = vsub.s32 0, %v499
    %v501 = vrot.slane %v496, %v500
    %v503 = vadd.f32 %v495, %v501
    %vm504 = vcmask 7168
    %505 = vst.msk [vmem:[#allocation3] sm:$0xff] %vm504, %v503
    // Predicated region
    $region38: #{critic_forward.1} parent=1 // pred_check
      _
    $region39: #{critic_forward.1} parent=1 // pred_check_branch
      %507 = sbr.rel (0) target = $region41
    $region40: #{critic_forward.1} parent=1 // pred_region
      // Predicated region
      $region42: #{critic_forward.1} parent=40 // pred_check
        _
      $region43: #{critic_forward.1} parent=40 // pred_check_branch
        %509 = sbr.rel (0) target = $region45
      $region44: #{critic_forward.1} parent=40 // pred_region
        // Predicated region
        $region46: #{critic_forward.1} parent=44 // pred_check
          _
        $region47: #{critic_forward.1} parent=44 // pred_check_branch
          %511 = sbr.rel target = $region49
        $region48: #{critic_forward.1} parent=44 // pred_region
          // Predicated region
          $region61: #{critic_forward.1} parent=48 // pred_check
            _
          $region62: #{critic_forward.1} parent=48 // pred_check_branch
            %527 = sbr.rel (0) target = $region64
          $region63: #{critic_forward.1} parent=48 // pred_region
            %s529 = ssub.s32 4, 1
            loop: start=0, step=1, limit=1
            $region65: #{critic_forward.1} parent=63 // loop_pre_header
              _
            $region66: #{critic_forward.1} parent=63 // loop_header
              %s531 = sphi 0, %s535
              %p532 = scmp.ge.s32.totalorder %s531, 1
              %s536 = sphi [#allocation3], [#allocation3]
              %s537 = sphi %s9, %s9
            $region67: #{critic_forward.1} parent=63 // loop_header_branch
              %534 = sbr.rel (%p532) target = $region71
            $region68: #{critic_forward.1} parent=63 // loop_body
              %v538 = vld [vmem:[%s536] sm:%s529]
              %539 = vst [vmem:[%s537] sm:%s529] %v538
            $region69: #{critic_forward.1} parent=63 // loop_footer
              %s535 = sadd.s32 1, %s531
            $region70: #{critic_forward.1} parent=63 // loop_footer_branch
              %530 = sbr.rel target = $region66
            $region71: #{critic_forward.1} parent=63 // loop_exit
              _
          $region64: #{critic_forward.1} parent=48 // pred_fallthru
            _
        $region49: #{critic_forward.1} parent=44 // pred_fallthru
          _
        // Predicated region
        $region50: #{critic_forward.1} parent=44 // pred_check
          _
        $region51: #{critic_forward.1} parent=44 // pred_check_branch
          %513 = sbr.rel (0) target = $region53
        $region52: #{critic_forward.1} parent=44 // pred_region
          %s515 = ssub.s32 4, 1
          loop: start=0, step=1, limit=1
          $region54: #{critic_forward.1} parent=52 // loop_pre_header
            _
          $region55: #{critic_forward.1} parent=52 // loop_header
            %s517 = sphi 0, %s521
            %p518 = scmp.ge.s32.totalorder %s517, 1
            %s522 = sphi [#allocation3], [#allocation3]
            %s523 = sphi %s9, %s9
          $region56: #{critic_forward.1} parent=52 // loop_header_branch
            %520 = sbr.rel (%p518) target = $region60
          $region57: #{critic_forward.1} parent=52 // loop_body
            %v524 = vld [vmem:[%s522] sm:%s515]
            %525 = vst [vmem:[%s523] sm:%s515] %v524
          $region58: #{critic_forward.1} parent=52 // loop_footer
            %s521 = sadd.s32 1, %s517
          $region59: #{critic_forward.1} parent=52 // loop_footer_branch
            %516 = sbr.rel target = $region55
          $region60: #{critic_forward.1} parent=52 // loop_exit
            _
        $region53: #{critic_forward.1} parent=44 // pred_fallthru
          _
      $region45: #{critic_forward.1} parent=40 // pred_fallthru
        _
      %540 = vnop
    $region41: #{critic_forward.1} parent=1 // pred_fallthru
      _
    // Predicated region
    $region72: #{critic_forward.1} parent=1 // pred_check
      _
    $region73: #{critic_forward.1} parent=1 // pred_check_branch
      %542 = sbr.rel (0) target = $region75
    $region74: #{critic_forward.1} parent=1 // pred_region
      _
    $region75: #{critic_forward.1} parent=1 // pred_fallthru
      _

</llo_original>
